<compile_context>
chip_gen: v7x
topology: tpu7x:2x2x1
jax: 0.10.0
libtpu: 0.0.40
codegen_flags: <defaults>
</compile_context>

<pallas_src>
import functools

import numpy as np
import jax
import jax.numpy as jnp
from jax import lax
from jax.experimental import pallas as pl
from jax.experimental.pallas import tpu as pltpu

_LANES = 128
_TARGET_BLOCK_BYTES = 2 * 1024 * 1024   # per-input mask block (sweep 1-4 MiB; prefer 4 MiB on v7x)
_MAX_TILE_ROWS = 8192
_CHUNK_ROWS = 512                       # in-kernel sub-slice size (bounds VMEM temporaries)


# ---------------------------------------------------------------------------
# Kernel
# ---------------------------------------------------------------------------
def _mutual_consistency_kernel(gtm_ref, snm_ref, clm_ref, pred_ref, ref2_ref, tail_ref,
                               out_ref,
                               acc_cl, acc_gt, acc_sn, acc_igt, acc_isn,
                               *, gamma, smooth, batch, n_cp, n_rows, mask_tail, chunk_rows):
    i = pl.program_id(0)
    n_steps = pl.num_programs(0)
    tile_rows = gtm_ref.shape[0]
    acc_rows = acc_cl.shape[0]
    n_chunks = tile_rows // chunk_rows        # static; wrapper guarantees divisibility

    @pl.when(i == 0)
    def _init():
        for a in (acc_cl, acc_gt, acc_sn, acc_igt, acc_isn):
            a[...] = jnp.zeros_like(a)

    def _part(x):
        # (r, 128) f32 -> (acc_rows, 128). With acc_rows == 8 this is a layout-free
        # sublane-group reshape + pure vreg adds (no per-chunk cross-lane XLU reduce).
        r = x.shape[0]
        if acc_rows == 8:
            return jnp.sum(x.reshape(r // 8, 8, _LANES), axis=0)
        return jnp.sum(x, axis=0, keepdims=True)

    def _accum(masked):
        base = i * tile_rows

        def partials(g, sn, cl, row0):
            g = g.astype(jnp.float32)
            sn = sn.astype(jnp.float32)
            cl = cl.astype(jnp.float32)
            if masked:
                # NOTE: masking MUST stay ahead of the products below (review concern #2);
                # the overhanging rows of the last block read unspecified data.
                rid = lax.broadcasted_iota(jnp.int32, g.shape, 0) + row0
                ok = rid < n_rows
                zero = jnp.float32(0.0)
                g = jnp.where(ok, g, zero)
                sn = jnp.where(ok, sn, zero)
                cl = jnp.where(ok, cl, zero)
            return (_part(cl), _part(g), _part(sn), _part(cl * g), _part(cl * sn))

        if n_chunks == 1:
            p = partials(gtm_ref[...], snm_ref[...], clm_ref[...], base)
        else:
            def body(c, carry):
                r0 = pl.multiple_of(c * chunk_rows, chunk_rows)
                p = partials(gtm_ref[pl.ds(r0, chunk_rows), :],
                             snm_ref[pl.ds(r0, chunk_rows), :],
                             clm_ref[pl.ds(r0, chunk_rows), :],
                             base + r0)
                return tuple(a + b for a, b in zip(carry, p))
            zeros = tuple(jnp.zeros((acc_rows, _LANES), jnp.float32) for _ in range(5))
            p = lax.fori_loop(0, n_chunks, body, zeros)

        for a, v in zip((acc_cl, acc_gt, acc_sn, acc_igt, acc_isn), p):
            a[...] += v

    if mask_tail:
        # Only the (single) overhanging last block pays the iota/where masking cost.
        @pl.when(i < n_steps - 1)
        def _body_blocks():
            _accum(False)

        @pl.when(i == n_steps - 1)
        def _last_block():
            _accum(True)
    else:
        _accum(False)

    # ---- finalize: Dice terms + batched min-over-shift MSE + gamma blend ------------
    @pl.when(i == n_steps - 1)
    def _finalize():
        s_cl = jnp.sum(acc_cl[...]) + tail_ref[0]
        s_gt = jnp.sum(acc_gt[...]) + tail_ref[1]
        s_sn = jnp.sum(acc_sn[...]) + tail_ref[2]
        i_gt = jnp.sum(acc_igt[...]) + tail_ref[3]
        i_sn = jnp.sum(acc_isn[...]) + tail_ref[4]
        dice_gt = 1.0 - (2.0 * i_gt + smooth) / (s_cl + s_gt + smooth)
        dice_sn = 1.0 - (2.0 * i_sn + smooth) / (s_cl + s_sn + smooth)

        pred = pred_ref[...]                    # (2B, 2N) lane-dense predictions
        ref2 = ref2_ref[...]                    # (2B, 4N) reference doubled along lanes
        L = 2 * n_cp
        best = None
        for s in range(n_cp):                   # static unroll over all cyclic shifts
            # ref2[:, 2s:2s+2N] is the reference rolled by -s control points; the min over
            # s = 0..N-1 covers exactly the same set as forward rolls.  Direct (numerically
            # safe) form: sum((pred - shifted_ref)**2).
            d = pred - ref2[:, 2 * s:2 * s + L]
            sse = jnp.sum(d * d, axis=-1, keepdims=True)      # (2B, 1)
            best = sse if best is None else jnp.minimum(best, sse)
        min_mse = best / jnp.float32(L)                       # per-sample min MSE

        rowid = lax.broadcasted_iota(jnp.int32, min_mse.shape, 0)
        seg_tot = jnp.sum(jnp.where(rowid < batch, min_mse, 0.0))    # rows 0..B-1
        cons_tot = jnp.sum(jnp.where(rowid >= batch, min_mse, 0.0))  # rows B..2B-1

        total = ((1.0 - gamma) * (dice_gt + seg_tot / batch)
                 + gamma * (dice_sn + cons_tot / batch))
        out_ref[...] = jnp.broadcast_to(total, (1, 1)).astype(jnp.float32)


# ---------------------------------------------------------------------------
# Wrapper
# ---------------------------------------------------------------------------
def _flatten_mask(mask):
    """Flatten a mask, keeping its native (narrow) dtype for HBM streaming."""
    m = jnp.asarray(mask)
    if m.dtype == jnp.bool_:
        m = m.astype(jnp.int8)    # keep 1-byte stream; avoid i1 on the DMA path
    return m.reshape(-1)


def _as_rows(flat, n_body):
    rows = n_body // _LANES
    if n_body == flat.shape[0]:
        return flat.reshape(rows, _LANES)            # pure reshape, no copy (common case)
    return flat[:n_body].reshape(rows, _LANES)       # ragged: aligned body only


def mutual_consistency(ground_truth_mask, ground_truth_contour, snake_gt_size,
                       snake_classic_size, snake_mask, classic_contour,
                       classic_mask, gamma, smooth=1.0):
    gt_flat = _flatten_mask(ground_truth_mask)
    sn_flat = _flatten_mask(snake_mask)
    cl_flat = _flatten_mask(classic_mask)
    n = gt_flat.shape[0]
    assert sn_flat.shape[0] == n and cl_flat.shape[0] == n  # DiceLoss requires same shapes

    if n < _LANES:  # degenerate tiny mask: pad up to a single lane row (cheap at this size)
        pad = _LANES - n
        gt_flat = jnp.pad(gt_flat, (0, pad))
        sn_flat = jnp.pad(sn_flat, (0, pad))
        cl_flat = jnp.pad(cl_flat, (0, pad))
        n = _LANES

    n_body = (n // _LANES) * _LANES
    rows = n_body // _LANES
    body_gt = _as_rows(gt_flat, n_body)
    body_sn = _as_rows(sn_flat, n_body)
    body_cl = _as_rows(cl_flat, n_body)

    # <128-element ragged tail: fold its five Dice partial sums in via a tiny SMEM input.
    if n_body != n:
        tcl = cl_flat[n_body:].astype(jnp.float32)
        tgt = gt_flat[n_body:].astype(jnp.float32)
        tsn = sn_flat[n_body:].astype(jnp.float32)
        tail_sums = jnp.stack([tcl.sum(), tgt.sum(), tsn.sum(),
                               (tcl * tgt).sum(), (tcl * tsn).sum()]).astype(jnp.float32)
    else:
        tail_sums = jnp.zeros((5,), jnp.float32)

    # ---- contours: lane-dense (2B, 2N) predictions + (2B, 4N) doubled reference --------
    sgt = jnp.asarray(snake_gt_size, jnp.float32)
    scl = jnp.asarray(snake_classic_size, jnp.float32)
    gtc = jnp.asarray(ground_truth_contour, jnp.float32)
    clc = jnp.asarray(classic_contour, jnp.float32)
    b, n_cp, _ = sgt.shape
    pred = jnp.concatenate([sgt.reshape(b, 2 * n_cp), scl.reshape(b, 2 * n_cp)], axis=0)
    ref = jnp.concatenate([gtc.reshape(b, 2 * n_cp), clc.reshape(b, 2 * n_cp)], axis=0)
    ref2 = jnp.concatenate([ref, ref], axis=1)       # O(B*N); replaces the O(N^2) shift tensor

    # ---- tile sizing: ~2 MiB per input block, sized by the widest mask dtype ----------
    max_item = max(body_gt.dtype.itemsize, body_sn.dtype.itemsize, body_cl.dtype.itemsize)
    tile_rows = _TARGET_BLOCK_BYTES // (_LANES * max_item)
    tile_rows = max(8, min(_MAX_TILE_ROWS, (tile_rows // 8) * 8))
    if rows <= tile_rows:
        tile_rows = rows                              # single full-extent block
    num_tiles = -(-rows // tile_rows)
    mask_tail = (rows % tile_rows) != 0
    acc_rows = 8 if (tile_rows % 8 == 0) else 1
    chunk_rows = _CHUNK_ROWS if (tile_rows % _CHUNK_ROWS == 0) else tile_rows

    kernel = functools.partial(
        _mutual_consistency_kernel, gamma=float(gamma), smooth=float(smooth),
        batch=int(b), n_cp=int(n_cp), n_rows=int(rows), mask_tail=bool(mask_tail),
        chunk_rows=int(chunk_rows))

    def mask_spec():
        return pl.BlockSpec((tile_rows, _LANES), lambda i: (i, 0))

    # Explicit scoped-VMEM budget: double-buffered mask blocks + per-chunk f32 temps + misc.
    mask_block_bytes = 2 * tile_rows * _LANES * (body_gt.dtype.itemsize
                                                 + body_sn.dtype.itemsize
                                                 + body_cl.dtype.itemsize)
    temp_bytes = 6 * chunk_rows * _LANES * 4
    small_bytes = 2 * 4 * (pred.size + ref2.size) + 5 * acc_rows * _LANES * 4 + (1 << 16)
    vmem_limit = int(min(48 << 20,
                         max(16 << 20, mask_block_bytes + temp_bytes + small_bytes + (4 << 20))))

    mask_bytes = int(body_gt.size * body_gt.dtype.itemsize
                     + body_sn.size * body_sn.dtype.itemsize
                     + body_cl.size * body_cl.dtype.itemsize)
    cost = pl.CostEstimate(flops=int(10 * n_body + 6 * n_cp * pred.size),
                           transcendentals=0,
                           bytes_accessed=mask_bytes + int(4 * (pred.size + ref2.size)) + 24 + 4)

    out = pl.pallas_call(
        kernel,
        out_shape=jax.ShapeDtypeStruct((1, 1), jnp.float32),
        grid_spec=pltpu.PrefetchScalarGridSpec(
            num_scalar_prefetch=0,
            grid=(num_tiles,),
            in_specs=[mask_spec(), mask_spec(), mask_spec(),
                      pl.BlockSpec(pred.shape, lambda i: (0, 0)),   # DMA'd once
                      pl.BlockSpec(ref2.shape, lambda i: (0, 0)),   # DMA'd once
                      pl.BlockSpec(memory_space=pltpu.MemorySpace.SMEM)],  # 5 tail partials
            out_specs=pl.BlockSpec((1, 1), lambda i: (0, 0)),
            scratch_shapes=[pltpu.VMEM((acc_rows, _LANES), jnp.float32)] * 5),
        compiler_params=pltpu.CompilerParams(
            dimension_semantics=("arbitrary",),
            vmem_limit_bytes=vmem_limit),
        cost_estimate=cost,
    )(body_gt, body_sn, body_cl, pred, ref2, tail_sums)
    return out[0, 0]


# ---------------------------------------------------------------------------
# Pure-numpy reference (mirrors the PyTorch module literally)
# ---------------------------------------------------------------------------
def _reference(gt_mask, gt_contour, snake_gt, snake_classic,
               snake_mask, classic_contour, classic_mask, gamma, smooth=1.0):
    def dice(a, b):
        a = a.reshape(-1).astype(np.float64)
        b = b.reshape(-1).astype(np.float64)
        inter = (a * b).sum()
        return 1.0 - (2.0 * inter + smooth) / (a.sum() + b.sum() + smooth)

    def min_mse(pred, ref):
        n = pred.shape[0]
        vals = [((pred - np.roll(ref, s, axis=0)) ** 2).mean() for s in range(n)]
        return min(vals)

    b = gt_contour.shape[0]
    seg = sum(min_mse(snake_gt[i].astype(np.float64), gt_contour[i].astype(np.float64))
              for i in range(b))
    cons = sum(min_mse(snake_classic[i].astype(np.float64),
                       classic_contour[i].astype(np.float64)) for i in range(b))
    return ((1.0 - gamma) * (dice(classic_mask, gt_mask) + seg / b)
            + gamma * (dice(classic_mask, snake_mask) + cons / b))


# ---------------------------------------------------------------------------
# Demo
# ---------------------------------------------------------------------------
if __name__ == "__main__":
    key = jax.random.PRNGKey(0)
    k1, k2, k3, k4, k5, k6, k7 = jax.random.split(key, 7)

    B, C, H, W = 2, 1, 16, 16     # masks (NCHW)
    N_CP = 8                      # control points per contour
    GAMMA = 0.3                   # module __init__ hyper-parameter (no learned weights)

    # Binary masks streamed as int8 (1 B/elem HBM traffic); classic_mask is an f32 prob. map.
    ground_truth_mask = (jax.random.uniform(k1, (B, C, H, W)) > 0.5).astype(jnp.int8)
    snake_mask = (jax.random.uniform(k2, (B, C, H, W)) > 0.5).astype(jnp.int8)
    classic_mask = jax.random.uniform(k3, (B, C, H, W), dtype=jnp.float32)

    ground_truth_contour = jax.random.uniform(k4, (B, N_CP, 2), dtype=jnp.float32)
    snake_gt_size = ground_truth_contour + 0.05 * jax.random.normal(k5, (B, N_CP, 2))
    classic_contour = jax.random.uniform(k6, (B, N_CP, 2), dtype=jnp.float32)
    snake_classic_size = classic_contour + 0.05 * jax.random.normal(k7, (B, N_CP, 2))

    loss = mutual_consistency(ground_truth_mask, ground_truth_contour, snake_gt_size,
                              snake_classic_size, snake_mask, classic_contour,
                              classic_mask, GAMMA)
    loss = jax.block_until_ready(loss)

    ref = _reference(np.asarray(ground_truth_mask), np.asarray(ground_truth_contour),
                     np.asarray(snake_gt_size), np.asarray(snake_classic_size),
                     np.asarray(snake_mask), np.asarray(classic_contour),
                     np.asarray(classic_mask), GAMMA)

    np.testing.assert_allclose(float(loss), float(ref), rtol=1e-3, atol=1e-5)
    print("KERNEL_OK")
</pallas_src>

<mosaic_0001>
module attributes {stable_mosaic.version = 11 : i64} {
  func.func @_mutual_consistency_kernel(%arg0: i32, %arg1: memref<4x128xi8, #tpu.memory_space<vmem>>, %arg2: memref<4x128xi8, #tpu.memory_space<vmem>>, %arg3: memref<4x128xf32, #tpu.memory_space<vmem>>, %arg4: memref<4x16xf32, #tpu.memory_space<vmem>>, %arg5: memref<4x32xf32, #tpu.memory_space<vmem>>, %arg6: memref<5xf32, #tpu.memory_space<smem>>, %arg7: memref<1x1xf32, #tpu.memory_space<vmem>>, %arg8: memref<1x128xf32, #tpu.memory_space<vmem>>, %arg9: memref<1x128xf32, #tpu.memory_space<vmem>>, %arg10: memref<1x128xf32, #tpu.memory_space<vmem>>, %arg11: memref<1x128xf32, #tpu.memory_space<vmem>>, %arg12: memref<1x128xf32, #tpu.memory_space<vmem>>) attributes {dimension_semantics = [#tpu.dimension_semantics<arbitrary>], iteration_bounds = array<i64: 1>, scalar_prefetch = 0 : i64, scratch_operands = 5 : i64, tpu.core_type = #tpu.core_type<tc>, window_params = [{transform_indices = @transform_0, window_bounds = array<i64: 4, 128>}, {transform_indices = @transform_1, window_bounds = array<i64: 4, 128>}, {transform_indices = @transform_2, window_bounds = array<i64: 4, 128>}, {pipeline_mode = #tpu.pipeline_mode<synchronous>, transform_indices = @transform_3, window_bounds = array<i64: 4, 16>}, {pipeline_mode = #tpu.pipeline_mode<synchronous>, transform_indices = @transform_4, window_bounds = array<i64: 4, 32>}, {transform_indices = @transform_5, window_bounds = array<i64: 5>}, {pipeline_mode = #tpu.pipeline_mode<synchronous>, transform_indices = @transform_6, window_bounds = array<i64: 1, 1>}]} {
    %c0_i32 = arith.constant 0 : i32
    %0 = arith.cmpi eq, %arg0, %c0_i32 : i32
    %1 = arith.extui %0 : i1 to i32
    %c0_i32_0 = arith.constant 0 : i32
    %2 = arith.cmpi ne, %1, %c0_i32_0 : i32
    scf.if %2 {
      %cst_32 = arith.constant 0.000000e+00 : f32
      %38 = vector.broadcast %cst_32 : f32 to vector<1x128xf32>
      %c0_33 = arith.constant 0 : index
      %c0_34 = arith.constant 0 : index
      %39 = vector.load %arg8[%c0_33, %c0_34] : memref<1x128xf32, #tpu.memory_space<vmem>>, vector<1x128xf32>
      tpu.vector_store %arg8[%c0_33, %c0_34], %38 {strides = array<i32>} : memref<1x128xf32, #tpu.memory_space<vmem>>, vector<1x128xf32>,
      %cst_35 = arith.constant 0.000000e+00 : f32
      %40 = vector.broadcast %cst_35 : f32 to vector<1x128xf32>
      %c0_36 = arith.constant 0 : index
      %c0_37 = arith.constant 0 : index
      %41 = vector.load %arg9[%c0_36, %c0_37] : memref<1x128xf32, #tpu.memory_space<vmem>>, vector<1x128xf32>
      tpu.vector_store %arg9[%c0_36, %c0_37], %40 {strides = array<i32>} : memref<1x128xf32, #tpu.memory_space<vmem>>, vector<1x128xf32>,
      %cst_38 = arith.constant 0.000000e+00 : f32
      %42 = vector.broadcast %cst_38 : f32 to vector<1x128xf32>
      %c0_39 = arith.constant 0 : index
      %c0_40 = arith.constant 0 : index
      %43 = vector.load %arg10[%c0_39, %c0_40] : memref<1x128xf32, #tpu.memory_space<vmem>>, vector<1x128xf32>
      tpu.vector_store %arg10[%c0_39, %c0_40], %42 {strides = array<i32>} : memref<1x128xf32, #tpu.memory_space<vmem>>, vector<1x128xf32>,
      %cst_41 = arith.constant 0.000000e+00 : f32
      %44 = vector.broadcast %cst_41 : f32 to vector<1x128xf32>
      %c0_42 = arith.constant 0 : index
      %c0_43 = arith.constant 0 : index
      %45 = vector.load %arg11[%c0_42, %c0_43] : memref<1x128xf32, #tpu.memory_space<vmem>>, vector<1x128xf32>
      tpu.vector_store %arg11[%c0_42, %c0_43], %44 {strides = array<i32>} : memref<1x128xf32, #tpu.memory_space<vmem>>, vector<1x128xf32>,
      %cst_44 = arith.constant 0.000000e+00 : f32
      %46 = vector.broadcast %cst_44 : f32 to vector<1x128xf32>
      %c0_45 = arith.constant 0 : index
      %c0_46 = arith.constant 0 : index
      %47 = vector.load %arg12[%c0_45, %c0_46] : memref<1x128xf32, #tpu.memory_space<vmem>>, vector<1x128xf32>
      tpu.vector_store %arg12[%c0_45, %c0_46], %46 {strides = array<i32>} : memref<1x128xf32, #tpu.memory_space<vmem>>, vector<1x128xf32>,
    } else {
    }
    %c0 = arith.constant 0 : index
    %c0_1 = arith.constant 0 : index
    %3 = vector.load %arg1[%c0, %c0_1] : memref<4x128xi8, #tpu.memory_space<vmem>>, vector<4x128xi8>
    %c0_2 = arith.constant 0 : index
    %c0_3 = arith.constant 0 : index
    %4 = vector.load %arg2[%c0_2, %c0_3] : memref<4x128xi8, #tpu.memory_space<vmem>>, vector<4x128xi8>
    %c0_4 = arith.constant 0 : index
    %c0_5 = arith.constant 0 : index
    %5 = vector.load %arg3[%c0_4, %c0_5] : memref<4x128xf32, #tpu.memory_space<vmem>>, vector<4x128xf32>
    %6 = arith.sitofp %3 : vector<4x128xi8> to vector<4x128xf32>
    %7 = arith.sitofp %4 : vector<4x128xi8> to vector<4x128xf32>
    %cst = arith.constant dense<0.000000e+00> : vector<128xf32>
    %8 = vector.multi_reduction <add>, %5, %cst [0] : vector<4x128xf32> to vector<128xf32>
    %9 = vector.shape_cast %8 : vector<128xf32> to vector<1x128xf32>
    %cst_6 = arith.constant dense<0.000000e+00> : vector<128xf32>
    %10 = vector.multi_reduction <add>, %6, %cst_6 [0] : vector<4x128xf32> to vector<128xf32>
    %11 = vector.shape_cast %10 : vector<128xf32> to vector<1x128xf32>
    %cst_7 = arith.constant dense<0.000000e+00> : vector<128xf32>
    %12 = vector.multi_reduction <add>, %7, %cst_7 [0] : vector<4x128xf32> to vector<128xf32>
    %13 = vector.shape_cast %12 : vector<128xf32> to vector<1x128xf32>
    %14 = arith.mulf %5, %6 : vector<4x128xf32>
    %cst_8 = arith.constant dense<0.000000e+00> : vector<128xf32>
    %15 = vector.multi_reduction <add>, %14, %cst_8 [0] : vector<4x128xf32> to vector<128xf32>
    %16 = vector.shape_cast %15 : vector<128xf32> to vector<1x128xf32>
    %17 = arith.mulf %5, %7 : vector<4x128xf32>
    %cst_9 = arith.constant dense<0.000000e+00> : vector<128xf32>
    %18 = vector.multi_reduction <add>, %17, %cst_9 [0] : vector<4x128xf32> to vector<128xf32>
    %19 = vector.shape_cast %18 : vector<128xf32> to vector<1x128xf32>
    %c0_10 = arith.constant 0 : index
    %c0_11 = arith.constant 0 : index
    %20 = vector.load %arg8[%c0_10, %c0_11] : memref<1x128xf32, #tpu.memory_space<vmem>>, vector<1x128xf32>
    %21 = arith.addf %20, %9 : vector<1x128xf32>
    %c0_12 = arith.constant 0 : index
    %c0_13 = arith.constant 0 : index
    %22 = vector.load %arg8[%c0_12, %c0_13] : memref<1x128xf32, #tpu.memory_space<vmem>>, vector<1x128xf32>
    tpu.vector_store %arg8[%c0_12, %c0_13], %21 {strides = array<i32>} : memref<1x128xf32, #tpu.memory_space<vmem>>, vector<1x128xf32>,
    %c0_14 = arith.constant 0 : index
    %c0_15 = arith.constant 0 : index
    %23 = vector.load %arg9[%c0_14, %c0_15] : memref<1x128xf32, #tpu.memory_space<vmem>>, vector<1x128xf32>
    %24 = arith.addf %23, %11 : vector<1x128xf32>
    %c0_16 = arith.constant 0 : index
    %c0_17 = arith.constant 0 : index
    %25 = vector.load %arg9[%c0_16, %c0_17] : memref<1x128xf32, #tpu.memory_space<vmem>>, vector<1x128xf32>
    tpu.vector_store %arg9[%c0_16, %c0_17], %24 {strides = array<i32>} : memref<1x128xf32, #tpu.memory_space<vmem>>, vector<1x128xf32>,
    %c0_18 = arith.constant 0 : index
    %c0_19 = arith.constant 0 : index
    %26 = vector.load %arg10[%c0_18, %c0_19] : memref<1x128xf32, #tpu.memory_space<vmem>>, vector<1x128xf32>
    %27 = arith.addf %26, %13 : vector<1x128xf32>
    %c0_20 = arith.constant 0 : index
    %c0_21 = arith.constant 0 : index
    %28 = vector.load %arg10[%c0_20, %c0_21] : memref<1x128xf32, #tpu.memory_space<vmem>>, vector<1x128xf32>
    tpu.vector_store %arg10[%c0_20, %c0_21], %27 {strides = array<i32>} : memref<1x128xf32, #tpu.memory_space<vmem>>, vector<1x128xf32>,
    %c0_22 = arith.constant 0 : index
    %c0_23 = arith.constant 0 : index
    %29 = vector.load %arg11[%c0_22, %c0_23] : memref<1x128xf32, #tpu.memory_space<vmem>>, vector<1x128xf32>
    %30 = arith.addf %29, %16 : vector<1x128xf32>
    %c0_24 = arith.constant 0 : index
    %c0_25 = arith.constant 0 : index
    %31 = vector.load %arg11[%c0_24, %c0_25] : memref<1x128xf32, #tpu.memory_space<vmem>>, vector<1x128xf32>
    tpu.vector_store %arg11[%c0_24, %c0_25], %30 {strides = array<i32>} : memref<1x128xf32, #tpu.memory_space<vmem>>, vector<1x128xf32>,
    %c0_26 = arith.constant 0 : index
    %c0_27 = arith.constant 0 : index
    %32 = vector.load %arg12[%c0_26, %c0_27] : memref<1x128xf32, #tpu.memory_space<vmem>>, vector<1x128xf32>
    %33 = arith.addf %32, %19 : vector<1x128xf32>
    %c0_28 = arith.constant 0 : index
    %c0_29 = arith.constant 0 : index
    %34 = vector.load %arg12[%c0_28, %c0_29] : memref<1x128xf32, #tpu.memory_space<vmem>>, vector<1x128xf32>
    tpu.vector_store %arg12[%c0_28, %c0_29], %33 {strides = array<i32>} : memref<1x128xf32, #tpu.memory_space<vmem>>, vector<1x128xf32>,
    %c0_i32_30 = arith.constant 0 : i32
    %35 = arith.cmpi eq, %arg0, %c0_i32_30 : i32
    %36 = arith.extui %35 : i1 to i32
    %c0_i32_31 = arith.constant 0 : i32
    %37 = arith.cmpi ne, %36, %c0_i32_31 : i32
    scf.if %37 {
      %c0_32 = arith.constant 0 : index
      %c0_33 = arith.constant 0 : index
      %38 = vector.load %arg8[%c0_32, %c0_33] : memref<1x128xf32, #tpu.memory_space<vmem>>, vector<1x128xf32>
      %39 = vector.shape_cast %38 : vector<1x128xf32> to vector<1x1x128xf32>
      %cst_34 = arith.constant dense<0.000000e+00> : vector<1xf32>
      %40 = vector.multi_reduction <add>, %39, %cst_34 [1, 2] : vector<1x1x128xf32> to vector<1xf32>
      %41 = vector.shape_cast %40 : vector<1xf32> to vector<1x1x1xf32>
      %42 = vector.extract %41[0, 0, 0] : f32 from vector<1x1x1xf32>
      %c0_35 = arith.constant 0 : index
      %43 = memref.load %arg6[%c0_35] : memref<5xf32, #tpu.memory_space<smem>>
      %44 = arith.addf %42, %43 : f32
      %c0_36 = arith.constant 0 : index
      %c0_37 = arith.constant 0 : index
      %45 = vector.load %arg9[%c0_36, %c0_37] : memref<1x128xf32, #tpu.memory_space<vmem>>, vector<1x128xf32>
      %46 = vector.shape_cast %45 : vector<1x128xf32> to vector<1x1x128xf32>
      %cst_38 = arith.constant dense<0.000000e+00> : vector<1xf32>
      %47 = vector.multi_reduction <add>, %46, %cst_38 [1, 2] : vector<1x1x128xf32> to vector<1xf32>
      %48 = vector.shape_cast %47 : vector<1xf32> to vector<1x1x1xf32>
      %49 = vector.extract %48[0, 0, 0] : f32 from vector<1x1x1xf32>
      %c1 = arith.constant 1 : index
      %50 = memref.load %arg6[%c1] : memref<5xf32, #tpu.memory_space<smem>>
      %51 = arith.addf %49, %50 : f32
      %c0_39 = arith.constant 0 : index
      %c0_40 = arith.constant 0 : index
      %52 = vector.load %arg10[%c0_39, %c0_40] : memref<1x128xf32, #tpu.memory_space<vmem>>, vector<1x128xf32>
      %53 = vector.shape_cast %52 : vector<1x128xf32> to vector<1x1x128xf32>
      %cst_41 = arith.constant dense<0.000000e+00> : vector<1xf32>
      %54 = vector.multi_reduction <add>, %53, %cst_41 [1, 2] : vector<1x1x128xf32> to vector<1xf32>
      %55 = vector.shape_cast %54 : vector<1xf32> to vector<1x1x1xf32>
      %56 = vector.extract %55[0, 0, 0] : f32 from vector<1x1x1xf32>
      %c2 = arith.constant 2 : index
      %57 = memref.load %arg6[%c2] : memref<5xf32, #tpu.memory_space<smem>>
      %58 = arith.addf %56, %57 : f32
      %c0_42 = arith.constant 0 : index
      %c0_43 = arith.constant 0 : index
      %59 = vector.load %arg11[%c0_42, %c0_43] : memref<1x128xf32, #tpu.memory_space<vmem>>, vector<1x128xf32>
      %60 = vector.shape_cast %59 : vector<1x128xf32> to vector<1x1x128xf32>
      %cst_44 = arith.constant dense<0.000000e+00> : vector<1xf32>
      %61 = vector.multi_reduction <add>, %60, %cst_44 [1, 2] : vector<1x1x128xf32> to vector<1xf32>
      %62 = vector.shape_cast %61 : vector<1xf32> to vector<1x1x1xf32>
      %63 = vector.extract %62[0, 0, 0] : f32 from vector<1x1x1xf32>
      %c3 = arith.constant 3 : index
      %64 = memref.load %arg6[%c3] : memref<5xf32, #tpu.memory_space<smem>>
      %65 = arith.addf %63, %64 : f32
      %c0_45 = arith.constant 0 : index
      %c0_46 = arith.constant 0 : index
      %66 = vector.load %arg12[%c0_45, %c0_46] : memref<1x128xf32, #tpu.memory_space<vmem>>, vector<1x128xf32>
      %67 = vector.shape_cast %66 : vector<1x128xf32> to vector<1x1x128xf32>
      %cst_47 = arith.constant dense<0.000000e+00> : vector<1xf32>
      %68 = vector.multi_reduction <add>, %67, %cst_47 [1, 2] : vector<1x1x128xf32> to vector<1xf32>
      %69 = vector.shape_cast %68 : vector<1xf32> to vector<1x1x1xf32>
      %70 = vector.extract %69[0, 0, 0] : f32 from vector<1x1x1xf32>
      %c4 = arith.constant 4 : index
      %71 = memref.load %arg6[%c4] : memref<5xf32, #tpu.memory_space<smem>>
      %72 = arith.addf %70, %71 : f32
      %cst_48 = arith.constant 2.000000e+00 : f32
      %73 = arith.mulf %cst_48, %65 : f32
      %cst_49 = arith.constant 1.000000e+00 : f32
      %74 = arith.addf %73, %cst_49 : f32
      %75 = arith.addf %44, %51 : f32
      %cst_50 = arith.constant 1.000000e+00 : f32
      %76 = arith.addf %75, %cst_50 : f32
      %77 = arith.divf %74, %76 : f32
      %cst_51 = arith.constant 1.000000e+00 : f32
      %78 = arith.subf %cst_51, %77 : f32
      %cst_52 = arith.constant 2.000000e+00 : f32
      %79 = arith.mulf %cst_52, %72 : f32
      %cst_53 = arith.constant 1.000000e+00 : f32
      %80 = arith.addf %79, %cst_53 : f32
      %81 = arith.addf %44, %58 : f32
      %cst_54 = arith.constant 1.000000e+00 : f32
      %82 = arith.addf %81, %cst_54 : f32
      %83 = arith.divf %80, %82 : f32
      %cst_55 = arith.constant 1.000000e+00 : f32
      %84 = arith.subf %cst_55, %83 : f32
      %c0_56 = arith.constant 0 : index
      %c0_57 = arith.constant 0 : index
      %85 = vector.load %arg4[%c0_56, %c0_57] : memref<4x16xf32, #tpu.memory_space<vmem>>, vector<4x16xf32>
      %c0_58 = arith.constant 0 : index
      %c0_59 = arith.constant 0 : index
      %86 = vector.load %arg5[%c0_58, %c0_59] : memref<4x32xf32, #tpu.memory_space<vmem>>, vector<4x32xf32>
      %87 = vector.extract_strided_slice %86 {offsets = [0, 0], sizes = [4, 16], strides = [1, 1]} : vector<4x32xf32> to vector<4x16xf32>
      %88 = arith.subf %85, %87 : vector<4x16xf32>
      %89 = arith.mulf %88, %88 : vector<4x16xf32>
      %cst_60 = arith.constant dense<0.000000e+00> : vector<4xf32>
      %90 = vector.multi_reduction <add>, %89, %cst_60 [1] : vector<4x16xf32> to vector<4xf32>
      %91 = vector.shape_cast %90 : vector<4xf32> to vector<4x1xf32>
      %92 = vector.extract_strided_slice %86 {offsets = [0, 2], sizes = [4, 16], strides = [1, 1]} : vector<4x32xf32> to vector<4x16xf32>
      %93 = arith.subf %85, %92 : vector<4x16xf32>
      %94 = arith.mulf %93, %93 : vector<4x16xf32>
      %cst_61 = arith.constant dense<0.000000e+00> : vector<4xf32>
      %95 = vector.multi_reduction <add>, %94, %cst_61 [1] : vector<4x16xf32> to vector<4xf32>
      %96 = vector.shape_cast %95 : vector<4xf32> to vector<4x1xf32>
      %97 = arith.minimumf %91, %96 : vector<4x1xf32>
      %98 = vector.extract_strided_slice %86 {offsets = [0, 4], sizes = [4, 16], strides = [1, 1]} : vector<4x32xf32> to vector<4x16xf32>
      %99 = arith.subf %85, %98 : vector<4x16xf32>
      %100 = arith.mulf %99, %99 : vector<4x16xf32>
      %cst_62 = arith.constant dense<0.000000e+00> : vector<4xf32>
      %101 = vector.multi_reduction <add>, %100, %cst_62 [1] : vector<4x16xf32> to vector<4xf32>
      %102 = vector.shape_cast %101 : vector<4xf32> to vector<4x1xf32>
      %103 = arith.minimumf %97, %102 : vector<4x1xf32>
      %104 = vector.extract_strided_slice %86 {offsets = [0, 6], sizes = [4, 16], strides = [1, 1]} : vector<4x32xf32> to vector<4x16xf32>
      %105 = arith.subf %85, %104 : vector<4x16xf32>
      %106 = arith.mulf %105, %105 : vector<4x16xf32>
      %cst_63 = arith.constant dense<0.000000e+00> : vector<4xf32>
      %107 = vector.multi_reduction <add>, %106, %cst_63 [1] : vector<4x16xf32> to vector<4xf32>
      %108 = vector.shape_cast %107 : vector<4xf32> to vector<4x1xf32>
      %109 = arith.minimumf %103, %108 : vector<4x1xf32>
      %110 = vector.extract_strided_slice %86 {offsets = [0, 8], sizes = [4, 16], strides = [1, 1]} : vector<4x32xf32> to vector<4x16xf32>
      %111 = arith.subf %85, %110 : vector<4x16xf32>
      %112 = arith.mulf %111, %111 : vector<4x16xf32>
      %cst_64 = arith.constant dense<0.000000e+00> : vector<4xf32>
      %113 = vector.multi_reduction <add>, %112, %cst_64 [1] : vector<4x16xf32> to vector<4xf32>
      %114 = vector.shape_cast %113 : vector<4xf32> to vector<4x1xf32>
      %115 = arith.minimumf %109, %114 : vector<4x1xf32>
      %116 = vector.extract_strided_slice %86 {offsets = [0, 10], sizes = [4, 16], strides = [1, 1]} : vector<4x32xf32> to vector<4x16xf32>
      %117 = arith.subf %85, %116 : vector<4x16xf32>
      %118 = arith.mulf %117, %117 : vector<4x16xf32>
      %cst_65 = arith.constant dense<0.000000e+00> : vector<4xf32>
      %119 = vector.multi_reduction <add>, %118, %cst_65 [1] : vector<4x16xf32> to vector<4xf32>
      %120 = vector.shape_cast %119 : vector<4xf32> to vector<4x1xf32>
      %121 = arith.minimumf %115, %120 : vector<4x1xf32>
      %122 = vector.extract_strided_slice %86 {offsets = [0, 12], sizes = [4, 16], strides = [1, 1]} : vector<4x32xf32> to vector<4x16xf32>
      %123 = arith.subf %85, %122 : vector<4x16xf32>
      %124 = arith.mulf %123, %123 : vector<4x16xf32>
      %cst_66 = arith.constant dense<0.000000e+00> : vector<4xf32>
      %125 = vector.multi_reduction <add>, %124, %cst_66 [1] : vector<4x16xf32> to vector<4xf32>
      %126 = vector.shape_cast %125 : vector<4xf32> to vector<4x1xf32>
      %127 = arith.minimumf %121, %126 : vector<4x1xf32>
      %128 = vector.extract_strided_slice %86 {offsets = [0, 14], sizes = [4, 16], strides = [1, 1]} : vector<4x32xf32> to vector<4x16xf32>
      %129 = arith.subf %85, %128 : vector<4x16xf32>
      %130 = arith.mulf %129, %129 : vector<4x16xf32>
      %cst_67 = arith.constant dense<0.000000e+00> : vector<4xf32>
      %131 = vector.multi_reduction <add>, %130, %cst_67 [1] : vector<4x16xf32> to vector<4xf32>
      %132 = vector.shape_cast %131 : vector<4xf32> to vector<4x1xf32>
      %133 = arith.minimumf %127, %132 : vector<4x1xf32>
      %cst_68 = arith.constant 1.600000e+01 : f32
      %134 = vector.broadcast %cst_68 : f32 to vector<4x1xf32>
      %135 = arith.divf %133, %134 : vector<4x1xf32>
      %136 = tpu.iota {dimensions = array<i32: 0>} : vector<4x1xi32>
      %c2_i32 = arith.constant 2 : i32
      %137 = vector.broadcast %c2_i32 : i32 to vector<4x1xi32>
      %138 = arith.cmpi slt, %136, %137 : vector<4x1xi32>
      %cst_69 = arith.constant 0.000000e+00 : f32
      %139 = vector.broadcast %cst_69 : f32 to vector<4x1xf32>
      %140 = arith.select %138, %135, %139 : vector<4x1xi1>, vector<4x1xf32>
      %141 = vector.shape_cast %140 : vector<4x1xf32> to vector<1x4x1xf32>
      %cst_70 = arith.constant dense<0.000000e+00> : vector<1xf32>
      %142 = vector.multi_reduction <add>, %141, %cst_70 [1, 2] : vector<1x4x1xf32> to vector<1xf32>
      %143 = vector.shape_cast %142 : vector<1xf32> to vector<1x1x1xf32>
      %144 = vector.extract %143[0, 0, 0] : f32 from vector<1x1x1xf32>
      %c2_i32_71 = arith.constant 2 : i32
      %145 = vector.broadcast %c2_i32_71 : i32 to vector<4x1xi32>
      %146 = arith.cmpi sge, %136, %145 : vector<4x1xi32>
      %cst_72 = arith.constant 0.000000e+00 : f32
      %147 = vector.broadcast %cst_72 : f32 to vector<4x1xf32>
      %148 = arith.select %146, %135, %147 : vector<4x1xi1>, vector<4x1xf32>
      %149 = vector.shape_cast %148 : vector<4x1xf32> to vector<1x4x1xf32>
      %cst_73 = arith.constant dense<0.000000e+00> : vector<1xf32>
      %150 = vector.multi_reduction <add>, %149, %cst_73 [1, 2] : vector<1x4x1xf32> to vector<1xf32>
      %151 = vector.shape_cast %150 : vector<1xf32> to vector<1x1x1xf32>
      %152 = vector.extract %151[0, 0, 0] : f32 from vector<1x1x1xf32>
      %cst_74 = arith.constant 2.000000e+00 : f32
      %153 = arith.divf %144, %cst_74 : f32
      %154 = arith.addf %78, %153 : f32
      %cst_75 = arith.constant 0.699999988 : f32
      %155 = arith.mulf %cst_75, %154 : f32
      %cst_76 = arith.constant 2.000000e+00 : f32
      %156 = arith.divf %152, %cst_76 : f32
      %157 = arith.addf %84, %156 : f32
      %cst_77 = arith.constant 3.000000e-01 : f32
      %158 = arith.mulf %cst_77, %157 : f32
      %159 = arith.addf %155, %158 : f32
      %160 = vector.broadcast %159 : f32 to vector<1x1xf32>
      %c0_78 = arith.constant 0 : index
      %c0_79 = arith.constant 0 : index
      %161 = vector.load %arg7[%c0_78, %c0_79] : memref<1x1xf32, #tpu.memory_space<vmem>>, vector<1x1xf32>
      tpu.vector_store %arg7[%c0_78, %c0_79], %160 {strides = array<i32>} : memref<1x1xf32, #tpu.memory_space<vmem>>, vector<1x1xf32>,
    } else {
    }
    return
  }
  func.func @transform_0(%arg0: i32) -> (i32, i32) {
    %c0_i32 = arith.constant 0 : i32
    %c0_i32_0 = arith.constant 0 : i32
    return %arg0, %c0_i32 : i32, i32
  }
  func.func @transform_1(%arg0: i32) -> (i32, i32) {
    %c0_i32 = arith.constant 0 : i32
    %c0_i32_0 = arith.constant 0 : i32
    return %arg0, %c0_i32 : i32, i32
  }
  func.func @transform_2(%arg0: i32) -> (i32, i32) {
    %c0_i32 = arith.constant 0 : i32
    %c0_i32_0 = arith.constant 0 : i32
    return %arg0, %c0_i32 : i32, i32
  }
  func.func @transform_3(%arg0: i32) -> (i32, i32) {
    %c0_i32 = arith.constant 0 : i32
    %c0_i32_0 = arith.constant 0 : i32
    %c0_i32_1 = arith.constant 0 : i32
    return %c0_i32, %c0_i32_0 : i32, i32
  }
  func.func @transform_4(%arg0: i32) -> (i32, i32) {
    %c0_i32 = arith.constant 0 : i32
    %c0_i32_0 = arith.constant 0 : i32
    %c0_i32_1 = arith.constant 0 : i32
    return %c0_i32, %c0_i32_0 : i32, i32
  }
  func.func @transform_5(%arg0: i32) -> i32 {
    %c0_i32 = arith.constant 0 : i32
    %c0_i32_0 = arith.constant 0 : i32
    return %c0_i32 : i32
  }
  func.func @transform_6(%arg0: i32) -> (i32, i32) {
    %c0_i32 = arith.constant 0 : i32
    %c0_i32_0 = arith.constant 0 : i32
    %c0_i32_1 = arith.constant 0 : i32
    return %c0_i32, %c0_i32_0 : i32, i32
  }
}

</mosaic_0001>

<llo_original>
// kernel: tpu_custom_call.1
$region0: #{tpu_custom_call.1}
  #allocation0 [shape = 'u32[]', space=smem, size = 0x4, offset = 0x4, fixed_abs, tag = 'smem constant byte address 0x4 - core index']
  #allocation1 [shape = 'u32[144,128]{1,0:T(1,128)}', space=vmem, size = 0x12000, scoped, tag = 'internal scratch']
  #allocation2 [shape = 'f32[1,128]{1,0:T(1,128)}', space=vmem, size = 0x200, scoped, tag = 'scratch operand']
  #allocation3 [shape = 'f32[1,128]{1,0:T(1,128)}', space=vmem, size = 0x200, scoped, tag = 'scratch operand']
  #allocation4 [shape = 'f32[1,128]{1,0:T(1,128)}', space=vmem, size = 0x200, scoped, tag = 'scratch operand']
  #allocation5 [shape = 'f32[1,128]{1,0:T(1,128)}', space=vmem, size = 0x200, scoped, tag = 'scratch operand']
  #allocation6 [shape = 'f32[1,128]{1,0:T(1,128)}', space=vmem, size = 0x200, scoped, tag = 'scratch operand']
  %s0 = inlined_call_operand.hbm [shape: s8[4,128], index: 0, kind: input, shape index: {}]
  %s1 = inlined_call_operand.vmem [shape: s8[4,128], index: 1, kind: input, shape index: {}]
  %s2 = inlined_call_operand.vmem [shape: f32[4,128], index: 2, kind: input, shape index: {}]
  %s3 = inlined_call_operand.vmem [shape: f32[4,16], index: 3, kind: input, shape index: {}]
  %s4 = inlined_call_operand.vmem [shape: f32[4,32], index: 4, kind: input, shape index: {}]
  %s5 = inlined_call_operand.vmem [shape: f32[5], index: 5, kind: input, shape index: {}]
  %s6 = inlined_call_operand.hbm [shape: f32[1,1], index: 6, kind: output, shape index: {}]
  %s7 = sld [smem:[#allocation0]]
  $region50: #{tpu_custom_call.1} parent=0
    _
  %s9 = ssub.s32 1, %s7
  %s10 = scalar_select 0, %s9, %s7
  $region1: #{tpu_custom_call.1} parent=0
    #allocation7 [shape = 'u8[512]{0}', space=vmem, size = 0x400, scoped, tag = 'input window, operand 0, single buffered']
    #allocation8 [shape = 's32[1]{0}', space=sflag, size = 0x4, scoped, tag = 'scoped memory for tpu_custom_call.1']
    #allocation9 [shape = 's32[1]{0}', space=sflag, size = 0x4, scoped, tag = 'scoped memory for tpu_custom_call.1']
    #allocation10 [shape = 's32[1]{0}', space=sflag, size = 0x4, scoped, tag = 'scoped memory for tpu_custom_call.1']
    #allocation11 [shape = 'u8[512]{0}', space=smem, size = 0x200, scoped, tag = 'input window, operand 5, single buffered']
    #allocation12 [shape = 'u8[512]{0}', space=vmem, size = 0x400, scoped, tag = 'output window, operand 0, single buffered']
    %11 = vsyncpa [#allocation8], 0
    %12 = vsyncpa [#allocation10], 0
    %13 = vsyncpa [#allocation9], 0
    // Predicated region
    $region2: #{tpu_custom_call.1} parent=1 // pred_check
      _
    $region3: #{tpu_custom_call.1} parent=1 // pred_check_branch
      %15 = sbr.rel (0) target = $region5
    $region4: #{tpu_custom_call.1} parent=1 // pred_region
      %s17 = ssub.s32 16, 16
      %18 = vsyncadd [#allocation8], %s17
      %s20 = sshll.u32 [#allocation7], 4
      %s21 = int_to_ptr.vmem [resolvable:$true] %s20
      %23 = dma.hbm_to_vmem [thread:$0]  %s0, 16, %s21, [#allocation8]
    $region5: #{tpu_custom_call.1} parent=1 // pred_fallthru
      _
    // Predicated region
    $region6: #{tpu_custom_call.1} parent=1 // pred_check
      _
    $region7: #{tpu_custom_call.1} parent=1 // pred_check_branch
      %25 = sbr.rel (0) target = $region9
    $region8: #{tpu_custom_call.1} parent=1 // pred_region
      _
    $region9: #{tpu_custom_call.1} parent=1 // pred_fallthru
      _
    // Predicated region
    $region10: #{tpu_custom_call.1} parent=1 // pred_check
      _
    $region11: #{tpu_custom_call.1} parent=1 // pred_check_branch
      %27 = sbr.rel (0) target = $region13
    $region12: #{tpu_custom_call.1} parent=1 // pred_region
      _
    $region13: #{tpu_custom_call.1} parent=1 // pred_fallthru
      _
    // Predicated region
    $region14: #{tpu_custom_call.1} parent=1 // pred_check
      _
    $region15: #{tpu_custom_call.1} parent=1 // pred_check_branch
      %29 = sbr.rel (0) target = $region17
    $region16: #{tpu_custom_call.1} parent=1 // pred_region
      _
    $region17: #{tpu_custom_call.1} parent=1 // pred_fallthru
      _
    // Predicated region
    $region18: #{tpu_custom_call.1} parent=1 // pred_check
      _
    $region19: #{tpu_custom_call.1} parent=1 // pred_check_branch
      %31 = sbr.rel (0) target = $region21
    $region20: #{tpu_custom_call.1} parent=1 // pred_region
      _
    $region21: #{tpu_custom_call.1} parent=1 // pred_fallthru
      _
    // Predicated region
    $region22: #{tpu_custom_call.1} parent=1 // pred_check
      _
    $region23: #{tpu_custom_call.1} parent=1 // pred_check_branch
      %33 = sbr.rel (0) target = $region25
    $region24: #{tpu_custom_call.1} parent=1 // pred_region
      %s35 = ssub.s32 16, 16
      %36 = vsyncadd [#allocation10], %s35
      %s38 = sshll.u32 %s5, 4
      %s39 = int_to_ptr.vmem [resolvable:$true] %s38
      %41 = dma.vmem_to_smem %s39, 16, [#allocation11], [#allocation10]
    $region25: #{tpu_custom_call.1} parent=1 // pred_fallthru
      _
    // Predicated region
    $region26: #{tpu_custom_call.1} parent=1 // pred_check
      _
    $region27: #{tpu_custom_call.1} parent=1 // pred_check_branch
      %43 = sbr.rel (0) target = $region29
    $region28: #{tpu_custom_call.1} parent=1 // pred_region
      %44 = dma.done [#allocation8], 16
    $region29: #{tpu_custom_call.1} parent=1 // pred_fallthru
      _
    // Predicated region
    $region30: #{tpu_custom_call.1} parent=1 // pred_check
      _
    $region31: #{tpu_custom_call.1} parent=1 // pred_check_branch
      %46 = sbr.rel (0) target = $region33
    $region32: #{tpu_custom_call.1} parent=1 // pred_region
      %47 = dma.done [#allocation10], 16
    $region33: #{tpu_custom_call.1} parent=1 // pred_fallthru
      _
    %48 = sfence
    %p49 = scmp.eq.s32.totalorder 0, 0
    // Predicated region
    $region34: #{tpu_custom_call.1} parent=1 // pred_check
      %p50 = pneg %p49
    $region35: #{tpu_custom_call.1} parent=1 // pred_check_branch
      %52 = sbr.rel (%p50) target = $region37
    $region36: #{tpu_custom_call.1} parent=1 // pred_region
      %53 = vst [vmem:[#allocation2] sm:$0x1] 0.0
      %54 = vst [vmem:[#allocation3] sm:$0x1] 0.0
      %55 = vst [vmem:[#allocation4] sm:$0x1] 0.0
      %56 = vst [vmem:[#allocation5] sm:$0x1] 0.0
      %57 = vst [vmem:[#allocation6] sm:$0x1] 0.0
    $region37: #{tpu_custom_call.1} parent=1 // pred_fallthru
      _
    %v58 = vld [vmem:[#allocation7] sm:$0x1]
    %v59 = vld [vmem:[%s1] sm:$0x1]
    %v60 = vld [vmem:[%s2] sm:$0xf]
    %v61 = vunpack.c.0.s8 %v58
    %v62 = vcvt.s32.f32 %v61
    %v63 = vunpack.c.0.s8 %v59
    %v64 = vcvt.s32.f32 %v63
    %vm65 = vcmask 1043456
    %v66 = vsel %vm65, %v60, 0.0
    %v67 = vrot.slane %v66, 4
    %v68 = vadd.f32 %v66, %v67
    %v69 = vrot.slane %v68, 2
    %v70 = vadd.f32 %v68, %v69
    %v71 = vrot.slane %v70, 1
    %v72 = vadd.f32 %v70, %v71
    %v73 = vsel %vm65, %v62, 0.0
    %v74 = vrot.slane %v73, 4
    %v75 = vadd.f32 %v73, %v74
    %v76 = vrot.slane %v75, 2
    %v77 = vadd.f32 %v75, %v76
    %v78 = vrot.slane %v77, 1
    %v79 = vadd.f32 %v77, %v78
    %v80 = vsel %vm65, %v64, 0.0
    %v81 = vrot.slane %v80, 4
    %v82 = vadd.f32 %v80, %v81
    %v83 = vrot.slane %v82, 2
    %v84 = vadd.f32 %v82, %v83
    %v85 = vrot.slane %v84, 1
    %v86 = vadd.f32 %v84, %v85
    %v87 = vmul.f32 %v60, %v62
    %v88 = vsel %vm65, %v87, 0.0
    %v89 = vrot.slane %v88, 4
    %v90 = vadd.f32 %v88, %v89
    %v91 = vrot.slane %v90, 2
    %v92 = vadd.f32 %v90, %v91
    %v93 = vrot.slane %v92, 1
    %v94 = vadd.f32 %v92, %v93
    %v95 = vmul.f32 %v60, %v64
    %v96 = vsel %vm65, %v95, 0.0
    %v97 = vrot.slane %v96, 4
    %v98 = vadd.f32 %v96, %v97
    %v99 = vrot.slane %v98, 2
    %v100 = vadd.f32 %v98, %v99
    %v101 = vrot.slane %v100, 1
    %v102 = vadd.f32 %v100, %v101
    %v103 = vld [vmem:[#allocation2] sm:$0x1]
    %v104 = vadd.f32 %v103, %v72
    %105 = vst [vmem:[#allocation2] sm:$0x1] %v104
    %v106 = vld [vmem:[#allocation3] sm:$0x1]
    %v107 = vadd.f32 %v106, %v79
    %108 = vst [vmem:[#allocation3] sm:$0x1] %v107
    %v109 = vld [vmem:[#allocation4] sm:$0x1]
    %v110 = vadd.f32 %v109, %v86
    %111 = vst [vmem:[#allocation4] sm:$0x1] %v110
    %v112 = vld [vmem:[#allocation5] sm:$0x1]
    %v113 = vadd.f32 %v112, %v94
    %114 = vst [vmem:[#allocation5] sm:$0x1] %v113
    %v115 = vld [vmem:[#allocation6] sm:$0x1]
    %v116 = vadd.f32 %v115, %v102
    %117 = vst [vmem:[#allocation6] sm:$0x1] %v116
    // Predicated region
    $region38: #{tpu_custom_call.1} parent=1 // pred_check
      %p118 = pneg %p49
    $region39: #{tpu_custom_call.1} parent=1 // pred_check_branch
      %120 = sbr.rel (%p118) target = $region41
    $region40: #{tpu_custom_call.1} parent=1 // pred_region
      %v121 = vld [vmem:[#allocation2] sm:$0x1]
      %vm122 = vcmask 1040384
      %v123 = vsel %vm122, %v121, 0.0
      %124 = vadd.xlane.f32.xlu0 %v123
      %v125 = vpop.xlane.xlu0 %124
      %v126 = vrot.slane %v125, 4
      %v127 = vadd.f32 %v125, %v126
      %v128 = vrot.slane %v127, 2
      %v129 = vadd.f32 %v127, %v128
      %v130 = vrot.slane %v129, 1
      %v131 = vadd.f32 %v129, %v130
      %s132 = vtos %v131
      %s133 = sld [smem:[#allocation11]]
      %s134 = sadd.f32 %s132, %s133
      %v135 = vld [vmem:[#allocation3] sm:$0x1]
      %v136 = vsel %vm122, %v135, 0.0
      %137 = vadd.xlane.f32.xlu0 %v136
      %v138 = vpop.xlane.xlu0 %137
      %v139 = vrot.slane %v138, 4
      %v140 = vadd.f32 %v138, %v139
      %v141 = vrot.slane %v140, 2
      %v142 = vadd.f32 %v140, %v141
      %v143 = vrot.slane %v142, 1
      %v144 = vadd.f32 %v142, %v143
      %s145 = vtos %v144
      %s146 = sld [smem:[#allocation11 + $0x1]]
      %s147 = sadd.f32 %s145, %s146
      %v148 = vld [vmem:[#allocation4] sm:$0x1]
      %v149 = vsel %vm122, %v148, 0.0
      %150 = vadd.xlane.f32.xlu0 %v149
      %v151 = vpop.xlane.xlu0 %150
      %v152 = vrot.slane %v151, 4
      %v153 = vadd.f32 %v151, %v152
      %v154 = vrot.slane %v153, 2
      %v155 = vadd.f32 %v153, %v154
      %v156 = vrot.slane %v155, 1
      %v157 = vadd.f32 %v155, %v156
      %s158 = vtos %v157
      %s159 = sld [smem:[#allocation11 + $0x2]]
      %s160 = sadd.f32 %s158, %s159
      %v161 = vld [vmem:[#allocation5] sm:$0x1]
      %v162 = vsel %vm122, %v161, 0.0
      %163 = vadd.xlane.f32.xlu0 %v162
      %v164 = vpop.xlane.xlu0 %163
      %v165 = vrot.slane %v164, 4
      %v166 = vadd.f32 %v164, %v165
      %v167 = vrot.slane %v166, 2
      %v168 = vadd.f32 %v166, %v167
      %v169 = vrot.slane %v168, 1
      %v170 = vadd.f32 %v168, %v169
      %s171 = vtos %v170
      %s172 = sld [smem:[#allocation11 + $0x3]]
      %s173 = sadd.f32 %s171, %s172
      %v174 = vld [vmem:[#allocation6] sm:$0x1]
      %v175 = vsel %vm122, %v174, 0.0
      %176 = vadd.xlane.f32.xlu0 %v175
      %v177 = vpop.xlane.xlu0 %176
      %v178 = vrot.slane %v177, 4
      %v179 = vadd.f32 %v177, %v178
      %v180 = vrot.slane %v179, 2
      %v181 = vadd.f32 %v179, %v180
      %v182 = vrot.slane %v181, 1
      %v183 = vadd.f32 %v181, %v182
      %s184 = vtos %v183
      %s185 = sld [smem:[#allocation11 + $0x4]]
      %s186 = sadd.f32 %s184, %s185
      %s187 = smul.f32 %s173, 2.0
      %s188 = sadd.f32 %s187, 1.0
      %s189 = sadd.f32 %s134, %s147
      %s190 = sadd.f32 %s189, 1.0
      %v191 = vstv %s190
      %v192 = vrcp.pop %v191
      %s193 = vtos %v192
      %s194 = smul.f32 %s188, %s193
      %s195 = ssub.f32 1.0, %s194
      %s196 = smul.f32 %s186, 2.0
      %s197 = sadd.f32 %s196, 1.0
      %s198 = sadd.f32 %s134, %s160
      %s199 = sadd.f32 %s198, 1.0
      %v200 = vstv %s199
      %v201 = vrcp.pop %v200
      %s202 = vtos %v201
      %s203 = smul.f32 %s197, %s202
      %s204 = ssub.f32 1.0, %s203
      %v205 = vld [vmem:[%s3] sm:$0xf]
      %v206 = vld [vmem:[%s4] sm:$0xf]
      %v207 = vsub.f32 %v205, %v206
      %v208 = vmul.f32 %v207, %v207
      %vm209 = vcmask 125952
      %v210 = vsel %vm209, %v208, 0.0
      %211 = vadd.xlane.f32.xlu0 %v210
      %v212 = vpop.xlane.xlu0 %211
      %214 = vrot.lane.b32.xlu0 %v206, 126
      %v215 = vpop.permute.xlu0 %214
      %v217 = vsub.f32 %v205, %v215
      %v218 = vmul.f32 %v217, %v217
      %v219 = vsel %vm209, %v218, 0.0
      %220 = vadd.xlane.f32.xlu0 %v219
      %v221 = vpop.xlane.xlu0 %220
      %v222 = vmin.f32 %v212, %v221
      %223 = vrot.lane.b32.xlu0 %v206, 124
      %v224 = vpop.permute.xlu0 %223
      %v226 = vsub.f32 %v205, %v224
      %v227 = vmul.f32 %v226, %v226
      %v228 = vsel %vm209, %v227, 0.0
      %229 = vadd.xlane.f32.xlu0 %v228
      %v230 = vpop.xlane.xlu0 %229
      %v231 = vmin.f32 %v222, %v230
      %232 = vrot.lane.b32.xlu0 %v206, 122
      %v233 = vpop.permute.xlu0 %232
      %v235 = vsub.f32 %v205, %v233
      %v236 = vmul.f32 %v235, %v235
      %v237 = vsel %vm209, %v236, 0.0
      %238 = vadd.xlane.f32.xlu0 %v237
      %v239 = vpop.xlane.xlu0 %238
      %v240 = vmin.f32 %v231, %v239
      %241 = vrot.lane.b32.xlu0 %v206, 120
      %v242 = vpop.permute.xlu0 %241
      %v244 = vsub.f32 %v205, %v242
      %v245 = vmul.f32 %v244, %v244
      %v246 = vsel %vm209, %v245, 0.0
      %247 = vadd.xlane.f32.xlu0 %v246
      %v248 = vpop.xlane.xlu0 %247
      %v249 = vmin.f32 %v240, %v248
      %250 = vrot.lane.b32.xlu0 %v206, 118
      %v251 = vpop.permute.xlu0 %250
      %v253 = vsub.f32 %v205, %v251
      %v254 = vmul.f32 %v253, %v253
      %v255 = vsel %vm209, %v254, 0.0
      %256 = vadd.xlane.f32.xlu0 %v255
      %v257 = vpop.xlane.xlu0 %256
      %v258 = vmin.f32 %v249, %v257
      %259 = vrot.lane.b32.xlu0 %v206, 116
      %v260 = vpop.permute.xlu0 %259
      %v262 = vsub.f32 %v205, %v260
      %v263 = vmul.f32 %v262, %v262
      %v264 = vsel %vm209, %v263, 0.0
      %265 = vadd.xlane.f32.xlu0 %v264
      %v266 = vpop.xlane.xlu0 %265
      %v267 = vmin.f32 %v258, %v266
      %268 = vrot.lane.b32.xlu0 %v206, 114
      %v269 = vpop.permute.xlu0 %268
      %v271 = vsub.f32 %v205, %v269
      %v272 = vmul.f32 %v271, %v271
      %v273 = vsel %vm209, %v272, 0.0
      %274 = vadd.xlane.f32.xlu0 %v273
      %v275 = vpop.xlane.xlu0 %274
      %v276 = vmin.f32 %v267, %v275
      %v277 = vrcp.pop 16.0
      %v278 = vmul.f32 %v276, %v277
      %v279 = vlaneseq
      %v280 = vshrl.u32 %v279, 7
      %vm281 = vcmp.lt.s32.totalorder %v280, 2
      %v282 = vsel %vm281, %v278, 0.0
      %vm283 = vcmask 3072
      %v284 = vsel %vm283, %v282, 0.0
      %285 = vadd.xlane.f32.xlu0 %v284
      %v286 = vpop.xlane.xlu0 %285
      %v287 = vrot.slane %v286, 4
      %v288 = vadd.f32 %v286, %v287
      %v289 = vrot.slane %v288, 2
      %v290 = vadd.f32 %v288, %v289
      %v291 = vrot.slane %v290, 1
      %v292 = vadd.f32 %v290, %v291
      %s293 = vtos %v292
      %vm294 = vcmp.ge.s32.totalorder %v280, 2
      %v295 = vsel %vm294, %v278, 0.0
      %v296 = vsel %vm283, %v295, 0.0
      %297 = vadd.xlane.f32.xlu0 %v296
      %v298 = vpop.xlane.xlu0 %297
      %v299 = vrot.slane %v298, 4
      %v300 = vadd.f32 %v298, %v299
      %v301 = vrot.slane %v300, 2
      %v302 = vadd.f32 %v300, %v301
      %v303 = vrot.slane %v302, 1
      %v304 = vadd.f32 %v302, %v303
      %s305 = vtos %v304
      %v306 = vrcp.pop 2.0
      %s307 = vtos %v306
      %s308 = smul.f32 %s293, %s307
      %s309 = sadd.f32 %s195, %s308
      %s310 = smul.f32 %s309, 0.7
      %v311 = vrcp.pop 2.0
      %s312 = vtos %v311
      %s313 = smul.f32 %s305, %s312
      %s314 = sadd.f32 %s204, %s313
      %s315 = smul.f32 %s314, 0.3
      %s316 = sadd.f32 %s310, %s315
      %v317 = vstv %s316
      %vm318 = vcmask 0
      %319 = vst.msk [vmem:[#allocation12] sm:$0x1] %vm318, %v317
    $region41: #{tpu_custom_call.1} parent=1 // pred_fallthru
      _
    // Predicated region
    $region42: #{tpu_custom_call.1} parent=1 // pred_check
      _
    $region43: #{tpu_custom_call.1} parent=1 // pred_check_branch
      %321 = sbr.rel (0) target = $region45
    $region44: #{tpu_custom_call.1} parent=1 // pred_region
      %s323 = ssub.s32 16, 16
      %324 = vsyncadd [#allocation9], %s323
      %s326 = sshll.u32 [#allocation12], 4
      %s327 = int_to_ptr.vmem [resolvable:$true] %s326
      %329 = dma.vmem_to_hbm [thread:$0]  %s327, 16, %s6, [#allocation9]
    $region45: #{tpu_custom_call.1} parent=1 // pred_fallthru
      _
    // Predicated region
    $region46: #{tpu_custom_call.1} parent=1 // pred_check
      _
    $region47: #{tpu_custom_call.1} parent=1 // pred_check_branch
      %331 = sbr.rel (0) target = $region49
    $region48: #{tpu_custom_call.1} parent=1 // pred_region
      %332 = dma.done [#allocation9], 16
    $region49: #{tpu_custom_call.1} parent=1 // pred_fallthru
      _
    %333 = vsyncpa [#allocation8], 1
    %334 = vsyncpa [#allocation9], 1
    %335 = vsyncpa [#allocation10], 1

</llo_original>
